<compile_context>
chip_gen: v7x
topology: tpu7x:2x2x1
jax: 0.10.0
libtpu: 0.0.40
codegen_flags: <defaults>
</compile_context>

<pallas_src>
import math
import numpy as np
import jax
import jax.numpy as jnp
from jax.experimental import pallas as pl
from jax.experimental.pallas import tpu as pltpu


def get_1d_sincos_pos_embed_from_grid(embed_dim, pos):
    assert embed_dim % 2 == 0
    omega = np.arange(embed_dim // 2, dtype=np.float64)
    omega /= embed_dim / 2.0
    omega = 1.0 / 10000 ** omega
    pos = pos.reshape(-1)
    out = np.einsum('m,d->md', pos, omega)
    emb_sin = np.sin(out)
    emb_cos = np.cos(out)
    emb = np.concatenate([emb_sin, emb_cos], axis=1)
    return emb  # (M, D) float64


def _round_up(x, m):
    return ((x + m - 1) // m) * m


def _choose_row_tile(T, M, target=512):
    """Row tile RT: multiple of both T (pos periodicity) and 8 (sublane), ~target rows."""
    base = math.lcm(T, 8)
    want = max(1, min(target, M))
    return base * max(1, -(-want // base))


def _patch_embed_kernel(x_ref, w_ref, pos_ref, o_ref):
    # x_ref: (RT, K)  w_ref: (K, Hpad)  pos_ref: (RT, Hpad)  o_ref: (RT, Hpad)
    y = jnp.dot(x_ref[...], w_ref[...], preferred_element_type=jnp.float32)
    o_ref[...] = (y + pos_ref[...]).astype(o_ref.dtype)


def prepare_embedder_params(conv_w, conv_b, pos_embed, input_dtype=jnp.float32):
    """One-time parameter prep (hoisted out of the forward path).

    Returns:
      w_pad:    (K, Hpad)  conv weight reshaped/transposed, hidden padded to 128.
      posb_pad: (T, Hpad)  pos_embed with conv bias folded in, padded to 128.
    """
    hidden = conv_w.shape[0]
    K = int(np.prod(conv_w.shape[1:]))          # C * p * p
    T = pos_embed.shape[-2]
    Hpad = _round_up(hidden, 128)

    w_mat = conv_w.reshape(hidden, K).T.astype(input_dtype)        # (K, hidden)
    w_pad = jnp.pad(w_mat, ((0, 0), (0, Hpad - hidden)))           # (K, Hpad)

    posb = pos_embed.reshape(T, hidden).astype(jnp.float32) \
        + conv_b.astype(jnp.float32)[None, :]                      # bias folded in
    posb_pad = jnp.pad(posb, ((0, 0), (0, Hpad - hidden)))         # (T, Hpad)
    return w_pad, posb_pad


def previous_observation_embedder(prev_obs, w_pad, posb_pad, patch_size, hidden,
                                  rows_per_tile_target=512):
    """prev_obs: (N, steps, C, H, W) float32 (NCHW per-frame, PyTorch convention)."""
    N, steps, C, H, W = prev_obs.shape
    p = patch_size
    Hp, Wp = H // p, W // p
    T = Hp * Wp
    K = C * p * p
    B = N * steps
    M = B * T
    Hpad = w_pad.shape[1]
    input_dtype = w_pad.dtype

    # ---- glue: patchify exactly like Conv2d(kernel=stride=p) + flatten(2).T ----
    # TODO(synk): fuse this NCHW->patch relayout into the kernel (strided input
    # BlockSpec / in-VMEM rearrange) so it does not cost an extra HBM round trip
    # at large H, W.
    x = prev_obs.reshape(B, C, Hp, p, Wp, p)
    x = jnp.transpose(x, (0, 2, 4, 1, 3, 5))           # (B, Hp, Wp, C, p, p)
    patches = x.reshape(M, K).astype(input_dtype)      # flattened (B*T, K) rows

    RT = _choose_row_tile(T, M, rows_per_tile_target)
    M_pad = _round_up(M, RT)
    if M_pad != M:
        patches = jnp.pad(patches, ((0, M_pad - M), (0, 0)))

    # Same pos slab for every row tile (RT is a multiple of T).
    pos_tile = jnp.tile(posb_pad, (RT // T, 1))        # (RT, Hpad) float32

    out = pl.pallas_call(
        _patch_embed_kernel,
        out_shape=jax.ShapeDtypeStruct((M_pad, Hpad), prev_obs.dtype),
        grid_spec=pltpu.PrefetchScalarGridSpec(
            num_scalar_prefetch=0,
            grid=(M_pad // RT,),
            in_specs=[
                pl.BlockSpec((RT, K), lambda i: (i, 0)),       # streamed row tiles
                pl.BlockSpec((K, Hpad), lambda i: (0, 0)),     # resident weight
                pl.BlockSpec((RT, Hpad), lambda i: (0, 0)),    # resident pos(+bias)
            ],
            out_specs=pl.BlockSpec((RT, Hpad), lambda i: (i, 0)),
        ),
        compiler_params=pltpu.CompilerParams(
            dimension_semantics=("parallel",),
        ),
    )(patches, w_pad, pos_tile)

    # ---- glue: drop row / hidden padding, (N steps) T d -> N (steps T) d ----
    out = out[:M, :hidden]
    return out.reshape(N, steps * T, hidden)


def _reference(prev_obs, conv_w, conv_b, pos_embed, patch_size):
    # pure-JAX reference using lax conv, for verification
    N, steps, C, H, W = prev_obs.shape
    p = patch_size
    B = N * steps
    x = prev_obs.reshape(B, C, H, W)
    y = jax.lax.conv_general_dilated(
        x, conv_w, window_strides=(p, p), padding="VALID",
        dimension_numbers=("NCHW", "OIHW", "NCHW"))        # (B, hidden, Hp, Wp)
    y = y + conv_b[None, :, None, None]
    hidden = conv_w.shape[0]
    T = (H // p) * (W // p)
    y = y.reshape(B, hidden, T).transpose(0, 2, 1)          # (B, T, hidden)
    y = y + pos_embed.reshape(1, T, hidden)
    return y.reshape(N, steps * T, hidden)


if __name__ == "__main__":
    # small shapes consistent with the module
    N, steps, C, H, W = 2, 2, 4, 16, 16
    patch_size = 8
    hidden = 32
    T = (H // patch_size) * (W // patch_size)   # num_patches = 4

    key = jax.random.PRNGKey(0)
    k1, k2, k3 = jax.random.split(key, 3)
    prev_obs = jax.random.normal(k1, (N, steps, C, H, W), dtype=jnp.float32)
    conv_w = jax.random.normal(k2, (hidden, C, patch_size, patch_size), dtype=jnp.float32) * 0.02
    conv_b = jax.random.normal(k3, (hidden,), dtype=jnp.float32) * 0.02

    pos_embed_np = get_1d_sincos_pos_embed_from_grid(
        hidden, np.arange(T, dtype=np.float32)).astype(np.float32)
    pos_embed = jnp.asarray(pos_embed_np)[None]            # (1, T, hidden), frozen param

    # One-time param prep (weight transpose/pad, bias folded into pos_embed).
    # For v6e/v7x, pass input_dtype=jnp.bfloat16 here (and loosen test tolerance).
    w_pad, posb_pad = prepare_embedder_params(conv_w, conv_b, pos_embed,
                                              input_dtype=jnp.float32)

    out = previous_observation_embedder(prev_obs, w_pad, posb_pad, patch_size, hidden)
    out = jax.block_until_ready(out)

    ref = _reference(prev_obs, conv_w, conv_b, pos_embed, patch_size)
    assert out.shape == (N, steps * T, hidden)
    np.testing.assert_allclose(np.asarray(out), np.asarray(ref), rtol=1e-4, atol=1e-4)

    print("KERNEL_OK")
</pallas_src>

<mosaic_0001>
module attributes {stable_mosaic.version = 11 : i64} {
  func.func @_patch_embed_kernel(%arg0: i32, %arg1: memref<16x256xf32, #tpu.memory_space<vmem>>, %arg2: memref<256x128xf32, #tpu.memory_space<vmem>>, %arg3: memref<16x128xf32, #tpu.memory_space<vmem>>, %arg4: memref<16x128xf32, #tpu.memory_space<vmem>>) attributes {dimension_semantics = [#tpu.dimension_semantics<parallel>], iteration_bounds = array<i64: 1>, scalar_prefetch = 0 : i64, scratch_operands = 0 : i64, tpu.core_type = #tpu.core_type<tc>, window_params = [{transform_indices = @transform_0, window_bounds = array<i64: 16, 256>}, {pipeline_mode = #tpu.pipeline_mode<synchronous>, transform_indices = @transform_1, window_bounds = array<i64: 256, 128>}, {pipeline_mode = #tpu.pipeline_mode<synchronous>, transform_indices = @transform_2, window_bounds = array<i64: 16, 128>}, {transform_indices = @transform_3, window_bounds = array<i64: 16, 128>}]} {
    %c0 = arith.constant 0 : index
    %c0_0 = arith.constant 0 : index
    %0 = vector.load %arg1[%c0, %c0_0] : memref<16x256xf32, #tpu.memory_space<vmem>>, vector<16x256xf32>
    %c0_1 = arith.constant 0 : index
    %c0_2 = arith.constant 0 : index
    %1 = vector.load %arg2[%c0_1, %c0_2] : memref<256x128xf32, #tpu.memory_space<vmem>>, vector<256x128xf32>
    %cst = arith.constant dense<0.000000e+00> : vector<16x128xf32>
    %2 = tpu.matmul %0, %1, %cst {dimension_numbers = #tpu.dot_dimension_numbers<[1], [0], [0], [1], [0, 0, 1, 1], [], []>} : vector<16x256xf32>, vector<256x128xf32>, vector<16x128xf32> -> vector<16x128xf32>
    %c0_3 = arith.constant 0 : index
    %c0_4 = arith.constant 0 : index
    %3 = vector.load %arg3[%c0_3, %c0_4] : memref<16x128xf32, #tpu.memory_space<vmem>>, vector<16x128xf32>
    %4 = arith.addf %2, %3 : vector<16x128xf32>
    %c0_5 = arith.constant 0 : index
    %c0_6 = arith.constant 0 : index
    %5 = vector.load %arg4[%c0_5, %c0_6] : memref<16x128xf32, #tpu.memory_space<vmem>>, vector<16x128xf32>
    tpu.vector_store %arg4[%c0_5, %c0_6], %4 {strides = array<i32>} : memref<16x128xf32, #tpu.memory_space<vmem>>, vector<16x128xf32>,
    return
  }
  func.func @transform_0(%arg0: i32) -> (i32, i32) {
    %c0_i32 = arith.constant 0 : i32
    %c0_i32_0 = arith.constant 0 : i32
    return %arg0, %c0_i32 : i32, i32
  }
  func.func @transform_1(%arg0: i32) -> (i32, i32) {
    %c0_i32 = arith.constant 0 : i32
    %c0_i32_0 = arith.constant 0 : i32
    %c0_i32_1 = arith.constant 0 : i32
    return %c0_i32, %c0_i32_0 : i32, i32
  }
  func.func @transform_2(%arg0: i32) -> (i32, i32) {
    %c0_i32 = arith.constant 0 : i32
    %c0_i32_0 = arith.constant 0 : i32
    %c0_i32_1 = arith.constant 0 : i32
    return %c0_i32, %c0_i32_0 : i32, i32
  }
  func.func @transform_3(%arg0: i32) -> (i32, i32) {
    %c0_i32 = arith.constant 0 : i32
    %c0_i32_0 = arith.constant 0 : i32
    return %arg0, %c0_i32 : i32, i32
  }
}

</mosaic_0001>

<llo_original>
// kernel: tpu_custom_call.1
$region0: #{tpu_custom_call.1}
  #allocation0 [shape = 'u32[]', space=smem, size = 0x4, offset = 0x4, fixed_abs, tag = 'smem constant byte address 0x4 - core index']
  #allocation1 [shape = 'u32[144,128]{1,0:T(1,128)}', space=vmem, size = 0x12000, scoped, tag = 'internal scratch']
  %s0 = inlined_call_operand.hbm [shape: f32[16,256], index: 0, kind: input, shape index: {}]
  %s1 = inlined_call_operand.hbm [shape: f32[256,128], index: 1, kind: input, shape index: {}]
  %s2 = inlined_call_operand.hbm [shape: f32[16,128], index: 2, kind: input, shape index: {}]
  %s3 = inlined_call_operand.hbm [shape: f32[16,128], index: 3, kind: output, shape index: {}]
  %s4 = sld [smem:[#allocation0]]
  $region34: #{tpu_custom_call.1} parent=0
    _
  %s6 = ssub.s32 1, %s4
  %s7 = scalar_select 0, %s6, %s4
  $region1: #{tpu_custom_call.1} parent=0
    #allocation2 [shape = 'u8[16384]{0}', space=vmem, size = 0x4000, scoped, tag = 'input window, operand 0, single buffered']
    #allocation3 [shape = 's32[1]{0}', space=sflag, size = 0x4, scoped, tag = 'scoped memory for tpu_custom_call.1']
    #allocation4 [shape = 's32[1]{0}', space=sflag, size = 0x4, scoped, tag = 'scoped memory for tpu_custom_call.1']
    #allocation5 [shape = 'u8[131072]{0}', space=vmem, size = 0x20000, scoped, tag = 'input window, operand 1, single buffered']
    #allocation6 [shape = 's32[1]{0}', space=sflag, size = 0x4, scoped, tag = 'scoped memory for tpu_custom_call.1']
    #allocation7 [shape = 'u8[8192]{0}', space=vmem, size = 0x2000, scoped, tag = 'input window, operand 2, single buffered']
    #allocation8 [shape = 'u8[8192]{0}', space=vmem, size = 0x2000, scoped, tag = 'output window, operand 0, single buffered']
    %8 = vsyncpa [#allocation3], 0
    %9 = vsyncpa [#allocation6], 0
    %10 = vsyncpa [#allocation4], 0
    // Predicated region
    $region2: #{tpu_custom_call.1} parent=1 // pred_check
      _
    $region3: #{tpu_custom_call.1} parent=1 // pred_check_branch
      %12 = sbr.rel (0) target = $region5
    $region4: #{tpu_custom_call.1} parent=1 // pred_region
      %s14 = ssub.s32 512, 512
      %15 = vsyncadd [#allocation3], %s14
      %s16 = sshll.u32 [#allocation2], 4
      %s17 = int_to_ptr.vmem [resolvable:$true] %s16
      %22 = dma.hbm_to_vmem [thread:$0]  %s0, 512, %s17, [#allocation3], 256, 256, 16
    $region5: #{tpu_custom_call.1} parent=1 // pred_fallthru
      _
    // Predicated region
    $region6: #{tpu_custom_call.1} parent=1 // pred_check
      _
    $region7: #{tpu_custom_call.1} parent=1 // pred_check_branch
      %24 = sbr.rel (0) target = $region9
    $region8: #{tpu_custom_call.1} parent=1 // pred_region
      %s26 = ssub.s32 4096, 4096
      %27 = vsyncadd [#allocation6], %s26
      %s28 = sshll.u32 [#allocation5], 4
      %s29 = int_to_ptr.vmem [resolvable:$true] %s28
      %34 = dma.hbm_to_vmem [thread:$0]  %s1, 4096, %s29, [#allocation6], 128, 128, 8
    $region9: #{tpu_custom_call.1} parent=1 // pred_fallthru
      _
    // Predicated region
    $region10: #{tpu_custom_call.1} parent=1 // pred_check
      _
    $region11: #{tpu_custom_call.1} parent=1 // pred_check_branch
      %36 = sbr.rel (0) target = $region13
    $region12: #{tpu_custom_call.1} parent=1 // pred_region
      %s38 = ssub.s32 256, 256
      %39 = vsyncadd [#allocation6], %s38
      %s40 = sshll.u32 [#allocation7], 4
      %s41 = int_to_ptr.vmem [resolvable:$true] %s40
      %46 = dma.hbm_to_vmem [thread:$0]  %s2, 256, %s41, [#allocation6], 128, 128, 8
    $region13: #{tpu_custom_call.1} parent=1 // pred_fallthru
      _
    // Predicated region
    $region14: #{tpu_custom_call.1} parent=1 // pred_check
      _
    $region15: #{tpu_custom_call.1} parent=1 // pred_check_branch
      %48 = sbr.rel (0) target = $region17
    $region16: #{tpu_custom_call.1} parent=1 // pred_region
      %49 = dma.done [#allocation3], 512
    $region17: #{tpu_custom_call.1} parent=1 // pred_fallthru
      _
    // Predicated region
    $region18: #{tpu_custom_call.1} parent=1 // pred_check
      _
    $region19: #{tpu_custom_call.1} parent=1 // pred_check_branch
      %51 = sbr.rel (0) target = $region21
    $region20: #{tpu_custom_call.1} parent=1 // pred_region
      %52 = dma.done [#allocation6], 4096
    $region21: #{tpu_custom_call.1} parent=1 // pred_fallthru
      _
    // Predicated region
    $region22: #{tpu_custom_call.1} parent=1 // pred_check
      _
    $region23: #{tpu_custom_call.1} parent=1 // pred_check_branch
      %54 = sbr.rel (0) target = $region25
    $region24: #{tpu_custom_call.1} parent=1 // pred_region
      %55 = dma.done [#allocation6], 256
    $region25: #{tpu_custom_call.1} parent=1 // pred_fallthru
      _
    %v56 = vld [vmem:[#allocation2] sm:$0xff]
    %v57 = vld [vmem:[#allocation2 + $0x8] sm:$0xff]
    %v58 = vld [vmem:[#allocation2 + $0x10] sm:$0xff]
    %v59 = vld [vmem:[#allocation2 + $0x18] sm:$0xff]
    %v60 = vld [vmem:[#allocation5] sm:$0xff]
    %v61 = vld [vmem:[#allocation5 + $0x8] sm:$0xff]
    %v62 = vld [vmem:[#allocation5 + $0x10] sm:$0xff]
    %v63 = vld [vmem:[#allocation5 + $0x18] sm:$0xff]
    %v64 = vld [vmem:[#allocation5 + $0x20] sm:$0xff]
    %v65 = vld [vmem:[#allocation5 + $0x28] sm:$0xff]
    %v66 = vld [vmem:[#allocation5 + $0x30] sm:$0xff]
    %v67 = vld [vmem:[#allocation5 + $0x38] sm:$0xff]
    %v68 = vld [vmem:[#allocation5 + $0x40] sm:$0xff]
    %v69 = vld [vmem:[#allocation5 + $0x48] sm:$0xff]
    %v70 = vld [vmem:[#allocation5 + $0x50] sm:$0xff]
    %v71 = vld [vmem:[#allocation5 + $0x58] sm:$0xff]
    %v72 = vld [vmem:[#allocation5 + $0x60] sm:$0xff]
    %v73 = vld [vmem:[#allocation5 + $0x68] sm:$0xff]
    %v74 = vld [vmem:[#allocation5 + $0x70] sm:$0xff]
    %v75 = vld [vmem:[#allocation5 + $0x78] sm:$0xff]
    %v76 = vld [vmem:[#allocation5 + $0x80] sm:$0xff]
    %v77 = vld [vmem:[#allocation5 + $0x88] sm:$0xff]
    %v78 = vld [vmem:[#allocation5 + $0x90] sm:$0xff]
    %v79 = vld [vmem:[#allocation5 + $0x98] sm:$0xff]
    %v80 = vld [vmem:[#allocation5 + $0xa0] sm:$0xff]
    %v81 = vld [vmem:[#allocation5 + $0xa8] sm:$0xff]
    %v82 = vld [vmem:[#allocation5 + $0xb0] sm:$0xff]
    %v83 = vld [vmem:[#allocation5 + $0xb8] sm:$0xff]
    %v84 = vld [vmem:[#allocation5 + $0xc0] sm:$0xff]
    %v85 = vld [vmem:[#allocation5 + $0xc8] sm:$0xff]
    %v86 = vld [vmem:[#allocation5 + $0xd0] sm:$0xff]
    %v87 = vld [vmem:[#allocation5 + $0xd8] sm:$0xff]
    %v88 = vld [vmem:[#allocation5 + $0xe0] sm:$0xff]
    %v89 = vld [vmem:[#allocation5 + $0xe8] sm:$0xff]
    %v90 = vld [vmem:[#allocation5 + $0xf0] sm:$0xff]
    %v91 = vld [vmem:[#allocation5 + $0xf8] sm:$0xff]
    %v92 = vld [vmem:[#allocation7] sm:$0xff]
    %v93 = vld [vmem:[#allocation7 + $0x8] sm:$0xff]
    %94 = vmatprep.subr.mxu0 0.0
    %95 = vmatpush1.msra.mxu0 %v60
    %96 = vmatprep.subr.mxu0 0.0
    %97 = vmatpush1.msra.mxu0 %v61
    %98 = vmatprep.subr.mxu0 0.0
    %99 = vmatpush1.msra.mxu0 %v62
    %100 = vmatprep.subr.mxu0 0.0
    %101 = vmatpush1.msra.mxu0 %v63
    %102 = vmatprep.subr.mxu0 0.0
    %103 = vmatpush1.msra.mxu0 %v64
    %104 = vmatprep.subr.mxu0 0.0
    %105 = vmatpush1.msra.mxu0 %v65
    %106 = vmatprep.subr.mxu0 0.0
    %107 = vmatpush1.msra.mxu0 %v66
    %108 = vmatprep.subr.mxu0 0.0
    %109 = vmatpush1.msra.mxu0 %v67
    %110 = vmatprep.subr.mxu0 0.0
    %111 = vmatpush1.msra.mxu0 %v68
    %112 = vmatprep.subr.mxu0 0.0
    %113 = vmatpush1.msra.mxu0 %v69
    %114 = vmatprep.subr.mxu0 0.0
    %115 = vmatpush1.msra.mxu0 %v70
    %116 = vmatprep.subr.mxu0 0.0
    %117 = vmatpush1.msra.mxu0 %v71
    %118 = vmatprep.subr.mxu0 0.0
    %119 = vmatpush1.msra.mxu0 %v72
    %120 = vmatprep.subr.mxu0 0.0
    %121 = vmatpush1.msra.mxu0 %v73
    %122 = vmatprep.subr.mxu0 0.0
    %123 = vmatpush1.msra.mxu0 %v74
    %124 = vmatprep.subr.mxu0 0.0
    %125 = vmatpush1.msra.mxu0 %v75
    %126 = vmatprep.subr.mxu0 0.0
    %127 = vmatpush1.msra.mxu0 %v76
    %128 = vmatprep.subr.mxu0 0.0
    %129 = vmatpush1.msra.mxu0 %v77
    %130 = vmatprep.subr.mxu0 0.0
    %131 = vmatpush1.msra.mxu0 %v78
    %132 = vmatprep.subr.mxu0 0.0
    %133 = vmatpush1.msra.mxu0 %v79
    %134 = vmatprep.subr.mxu0 0.0
    %135 = vmatpush1.msra.mxu0 %v80
    %136 = vmatprep.subr.mxu0 0.0
    %137 = vmatpush1.msra.mxu0 %v81
    %138 = vmatprep.subr.mxu0 0.0
    %139 = vmatpush1.msra.mxu0 %v82
    %140 = vmatprep.subr.mxu0 0.0
    %141 = vmatpush1.msra.mxu0 %v83
    %142 = vmatprep.subr.mxu0 0.0
    %143 = vmatpush1.msra.mxu0 %v84
    %144 = vmatprep.subr.mxu0 0.0
    %145 = vmatpush1.msra.mxu0 %v85
    %146 = vmatprep.subr.mxu0 0.0
    %147 = vmatpush1.msra.mxu0 %v86
    %148 = vmatprep.subr.mxu0 0.0
    %149 = vmatpush1.msra.mxu0 %v87
    %150 = vmatprep.subr.mxu0 0.0
    %151 = vmatpush1.msra.mxu0 %v88
    %152 = vmatprep.subr.mxu0 0.0
    %153 = vmatpush1.msra.mxu0 %v89
    %154 = vmatprep.subr.mxu0 0.0
    %155 = vmatpush1.msra.mxu0 %v90
    %156 = vmatprep.subr.mxu0 0.0
    %157 = vmatpush1.msra.mxu0 %v91
    %158 = vmatprep.mubr.f32.mxu0 %v57
    %159 = vmatmul.mubr.f32.gmra.mrb[0].mxu0 %v56
    %v160 = vpop.f32.mrb[0].mxu0
    %v161 = vadd.f32 %v92, %v160
    %v162 = vpop.f32.mrb[0].mxu0
    %163 = vmatprep.mubr.f32.mxu0 %v59
    %164 = vmatmul.mubr.f32.gmra.mrb[0].mxu0 %v58
    %v165 = vpop.f32.mrb[0].mxu0
    %v166 = vadd.f32 %v93, %v165
    %v167 = vpop.f32.mrb[0].mxu0
    %168 = vdwg.mxu0
    %169 = vst [vmem:[#allocation8] sm:$0xff] %v161
    %170 = vst [vmem:[#allocation8 + $0x8] sm:$0xff] %v166
    // Predicated region
    $region26: #{tpu_custom_call.1} parent=1 // pred_check
      _
    $region27: #{tpu_custom_call.1} parent=1 // pred_check_branch
      %172 = sbr.rel (0) target = $region29
    $region28: #{tpu_custom_call.1} parent=1 // pred_region
      %s174 = ssub.s32 256, 256
      %175 = vsyncadd [#allocation4], %s174
      %s176 = sshll.u32 [#allocation8], 4
      %s177 = int_to_ptr.vmem [resolvable:$true] %s176
      %182 = dma.vmem_to_hbm [thread:$0]  %s177, 256, %s3, [#allocation4], 128, 128, 8
    $region29: #{tpu_custom_call.1} parent=1 // pred_fallthru
      _
    // Predicated region
    $region30: #{tpu_custom_call.1} parent=1 // pred_check
      _
    $region31: #{tpu_custom_call.1} parent=1 // pred_check_branch
      %184 = sbr.rel (0) target = $region33
    $region32: #{tpu_custom_call.1} parent=1 // pred_region
      %185 = dma.done [#allocation4], 256
    $region33: #{tpu_custom_call.1} parent=1 // pred_fallthru
      _
    %186 = vsyncpa [#allocation3], 1
    %187 = vsyncpa [#allocation6], 1
    %188 = vsyncpa [#allocation4], 1

</llo_original>
